<compile_context>
chip_gen: v7x
topology: tpu7x:2x2x1
jax: 0.10.0
libtpu: 0.0.40
codegen_flags: <defaults>
</compile_context>

<pallas_src>
import jax
import jax.numpy as jnp
from jax.experimental import pallas as pl
from jax.experimental.pallas import tpu as pltpu


def _round_up(x, m):
    return ((x + m - 1) // m) * m


# ----------------------------- Pallas kernel ------------------------------ #
def zero_head_kernel(fcat_ref, w_ref, dom_ref, mb_ref, out_ref):
    # fcat_ref: (Bt, E, 3H)  bf16  concatenated [start, end, entity] states
    # w_ref:    (3H, F)      bf16  fcn weight (in x out, F padded to 128)
    # dom_ref:  (Bt, F, L)   bf16  domain features, pre-transposed, L padded
    # mb_ref:   (Bt, 1, L)   f32   folded fcn-bias (bias @ dom^T) on valid
    #                              label slots, -inf on masked/padded slots
    # out_ref:  (Bt, E, L)   f32   masked logits
    Bt, E, I = fcat_ref.shape
    F = w_ref.shape[1]

    # fcn projection as one big (Bt*E, 3H) @ (3H, F) MXU matmul, f32 acc.
    fv = jnp.dot(fcat_ref[...].reshape(Bt * E, I), w_ref[...],
                 preferred_element_type=jnp.float32)            # (Bt*E, F)
    fv = fv.astype(jnp.bfloat16).reshape(Bt, E, F)

    # batched classification matmul; dom is already (F, L) so the MXU is fed
    # directly with L as the contiguous lane dim (lane-dense output store).
    logits = jnp.einsum('bef,bfl->bel', fv, dom_ref[...],
                        preferred_element_type=jnp.float32)     # (Bt, E, L)

    # single VPU add applies both the folded bias and the -inf domain mask.
    out_ref[...] = logits + mb_ref[...]


def zero_forward_pallas(fcat, w_t, bias, padded_domain_features, domain_mask,
                        *, block_b=8):
    """fcat: (B,E,3H) f32, w_t: (3H,F), bias: (F,), dom: (B,L,F), mask: (B,L) int32.

    Returns masked logits (B, E, L) float32 (-inf on masked label slots).
    """
    B, E, I = fcat.shape
    F = w_t.shape[1]
    L = padded_domain_features.shape[1]

    Fp = _round_up(F, 128)       # lane-align feature width (zero cols = no-op)
    Lp = _round_up(L, 128)       # lane-align label dim (output lane dim)
    Ep = _round_up(E, 8)         # sublane-align entity dim
    Bt = max(1, min(block_b, B))  # examples per grid step
    Bp = _round_up(B, Bt)

    # ---- wrapper-side layout plumbing (cheap XLA ops) ----
    w_p = jnp.pad(w_t, ((0, 0), (0, Fp - F)))
    bias_p = jnp.pad(bias, (0, Fp - F))
    dom_p = jnp.pad(padded_domain_features,
                    ((0, 0), (0, Lp - L), (0, Fp - F)))          # (B, Lp, Fp)
    mask_p = jnp.pad(domain_mask, ((0, 0), (0, Lp - L)))         # (B, Lp)

    # fold fcn bias into the classification matmul + build additive -inf mask
    bias_dot = jnp.einsum('blf,f->bl', dom_p, bias_p)            # (B, Lp)
    mb = jnp.where(mask_p > 0, bias_dot, jnp.float32(-jnp.inf))
    mb = mb[:, None, :].astype(jnp.float32)                      # (B, 1, Lp)

    # pre-transpose so the kernel RHS is already (K=F, N=L)
    dom_t = jnp.transpose(dom_p, (0, 2, 1))                      # (B, Fp, Lp)

    # pad batch / entity dims; cast MXU operands to bf16 (f32 accumulate)
    fcat_p = jnp.pad(fcat, ((0, Bp - B), (0, Ep - E), (0, 0)))
    dom_t = jnp.pad(dom_t, ((0, Bp - B), (0, 0), (0, 0)))
    mb = jnp.pad(mb, ((0, Bp - B), (0, 0), (0, 0)))

    fcat_bf = fcat_p.astype(jnp.bfloat16)
    w_bf = w_p.astype(jnp.bfloat16)
    dom_bf = dom_t.astype(jnp.bfloat16)

    grid_spec = pltpu.PrefetchScalarGridSpec(
        num_scalar_prefetch=0,
        grid=(Bp // Bt,),
        in_specs=[
            pl.BlockSpec((Bt, Ep, I), lambda b: (b, 0, 0)),
            pl.BlockSpec((I, Fp), lambda b: (0, 0)),
            pl.BlockSpec((Bt, Fp, Lp), lambda b: (b, 0, 0)),
            pl.BlockSpec((Bt, 1, Lp), lambda b: (b, 0, 0)),
        ],
        out_specs=pl.BlockSpec((Bt, Ep, Lp), lambda b: (b, 0, 0)),
    )
    out = pl.pallas_call(
        zero_head_kernel,
        out_shape=jax.ShapeDtypeStruct((Bp, Ep, Lp), jnp.float32),
        grid_spec=grid_spec,
        compiler_params=pltpu.CompilerParams(
            dimension_semantics=("parallel",)),
        # TODO(synk): for very large ontologies / LUKE-large on v7x (64 MiB
        # VMEM), add a second ("parallel") grid axis tiling Lp and keep fv in
        # a VMEM scratch computed under @pl.when(l_tile == 0); raise
        # vmem_limit_bytes on v6e if per-example blocks grow.
    )(fcat_bf, w_bf, dom_bf, mb)
    return out[:B, :E, :L]


# ------------------------------ JAX glue ----------------------------------- #
def gather_states(states, positions):
    # states: (B, W, H), positions: (B, E) -> (B, E, H)
    return jnp.take_along_axis(states, positions[:, :, None], axis=1)


def build_domain_features(features, null_label_feature, label_indices,
                          source_domains):
    """Mirrors [cat(null, features[idx])] + pad_2d: returns (B,L,F), (B,L), L."""
    per_example = []
    for dom in source_domains:
        idx = jnp.asarray(label_indices[dom], dtype=jnp.int32)
        feats = jnp.concatenate([null_label_feature, features[idx]], axis=0)
        per_example.append(feats)
    max_len = max(int(f.shape[0]) for f in per_example)
    fcn_output = features.shape[1]
    padded, masks = [], []
    for feats in per_example:
        n = int(feats.shape[0])
        pad = max_len - n
        if pad:
            feats = jnp.concatenate(
                [feats, jnp.zeros((pad, fcn_output), jnp.float32)], axis=0)
        padded.append(feats)
        masks.append(jnp.concatenate(
            [jnp.ones((n,), jnp.int32), jnp.zeros((pad,), jnp.int32)]))
    return jnp.stack(padded, 0), jnp.stack(masks, 0), max_len


def zero_forward(word_hidden_states, entity_hidden_states,
                 start_positions, end_positions,
                 fcn_weight_t, fcn_bias,
                 features, null_label_feature, label_indices, source_domains):
    start_states = gather_states(word_hidden_states, start_positions)
    end_states = gather_states(word_hidden_states, end_positions)
    fcat = jnp.concatenate([start_states, end_states, entity_hidden_states],
                           axis=2)                                  # (B,E,3H)
    dom_feats, dom_mask, max_labels = build_domain_features(
        features, null_label_feature, label_indices, source_domains)
    logits = zero_forward_pallas(fcat, fcn_weight_t, fcn_bias,
                                 dom_feats, dom_mask)
    return logits, max_labels
    # TODO(synk): CrossEntropyLoss(ignore_index=-1) branch (source_labels given)
    # is training-time glue, not a kernel hot path; omitted here.


# ------------------------------ reference ---------------------------------- #
def zero_forward_ref(fcat, w_t, bias, dom_feats, dom_mask):
    fv = jnp.einsum("bei,if->bef", fcat, w_t) + bias
    logits = jnp.einsum("bef,blf->bel", fv, dom_feats)
    return jnp.where(dom_mask[:, None, :] == 0, -jnp.inf, logits)


if __name__ == "__main__":
    key = jax.random.PRNGKey(0)
    B, W, E, H = 2, 12, 8, 32          # batch, word len, entities, hidden
    FEAT = 16                           # feature_size (= fcn_output)
    N_CONCEPTS = 10                     # rows in the domain feature table

    k = iter(jax.random.split(key, 10))
    word_hidden_states = jax.random.normal(next(k), (B, W, H), jnp.float32)
    entity_hidden_states = jax.random.normal(next(k), (B, E, H), jnp.float32)
    start_positions = jax.random.randint(next(k), (B, E), 0, W)
    end_positions = jnp.minimum(start_positions + 1, W - 1)

    # Parameters (deterministic, synthetic):
    features = jax.random.normal(next(k), (N_CONCEPTS, FEAT), jnp.float32)
    # nn.Linear(3H, FEAT): store weight transposed (in, out)
    fcn_weight_t = (jax.random.normal(next(k), (3 * H, FEAT), jnp.float32)
                    * (1.0 / jnp.sqrt(3.0 * H)))
    fcn_bias = jax.random.normal(next(k), (FEAT,), jnp.float32) * 0.01
    null_label_feature = jax.random.normal(next(k), (1, FEAT), jnp.float32)

    label_indices = {"news": [0, 1, 2], "bio": [3, 4, 5, 6, 7]}
    source_domains = ["news", "bio"]    # one domain per batch example

    logits, max_labels = zero_forward(
        word_hidden_states, entity_hidden_states,
        start_positions, end_positions,
        fcn_weight_t, fcn_bias,
        features, null_label_feature, label_indices, source_domains)
    logits = jax.block_until_ready(logits)

    # sanity check against a pure-JAX f32 reference (kernel uses bf16 operands
    # with f32 accumulation, so tolerances are bf16-level)
    start_states = gather_states(word_hidden_states, start_positions)
    end_states = gather_states(word_hidden_states, end_positions)
    fcat = jnp.concatenate([start_states, end_states, entity_hidden_states], 2)
    dom_feats, dom_mask, _ = build_domain_features(
        features, null_label_feature, label_indices, source_domains)
    ref = zero_forward_ref(fcat, fcn_weight_t, fcn_bias, dom_feats, dom_mask)

    finite_k = jnp.isfinite(logits)
    finite_r = jnp.isfinite(ref)
    assert bool(jnp.all(finite_k == finite_r))
    assert bool(jnp.allclose(jnp.where(finite_k, logits, 0.0),
                             jnp.where(finite_r, ref, 0.0),
                             atol=1e-1, rtol=5e-2))
    assert logits.shape == (B, E, max_labels)
    print("KERNEL_OK")
</pallas_src>

<mosaic_0001>
module attributes {stable_mosaic.version = 11 : i64} {
  func.func @zero_head_kernel(%arg0: i32, %arg1: memref<2x8x96xbf16, #tpu.memory_space<vmem>>, %arg2: memref<96x128xbf16, #tpu.memory_space<vmem>>, %arg3: memref<2x128x128xbf16, #tpu.memory_space<vmem>>, %arg4: memref<2x1x128xf32, #tpu.memory_space<vmem>>, %arg5: memref<2x8x128xf32, #tpu.memory_space<vmem>>) attributes {dimension_semantics = [#tpu.dimension_semantics<parallel>], iteration_bounds = array<i64: 1>, scalar_prefetch = 0 : i64, scratch_operands = 0 : i64, tpu.core_type = #tpu.core_type<tc>, window_params = [{transform_indices = @transform_0, window_bounds = array<i64: 2, 8, 96>}, {pipeline_mode = #tpu.pipeline_mode<synchronous>, transform_indices = @transform_1, window_bounds = array<i64: 96, 128>}, {transform_indices = @transform_2, window_bounds = array<i64: 2, 128, 128>}, {transform_indices = @transform_3, window_bounds = array<i64: 2, 1, 128>}, {transform_indices = @transform_4, window_bounds = array<i64: 2, 8, 128>}]} {
    %c0 = arith.constant 0 : index
    %c0_0 = arith.constant 0 : index
    %c0_1 = arith.constant 0 : index
    %0 = vector.load %arg1[%c0, %c0_0, %c0_1] : memref<2x8x96xbf16, #tpu.memory_space<vmem>>, vector<2x8x96xbf16>
    %1 = vector.shape_cast %0 : vector<2x8x96xbf16> to vector<16x96xbf16>
    %c0_2 = arith.constant 0 : index
    %c0_3 = arith.constant 0 : index
    %2 = vector.load %arg2[%c0_2, %c0_3] : memref<96x128xbf16, #tpu.memory_space<vmem>>, vector<96x128xbf16>
    %cst = arith.constant dense<0.000000e+00> : vector<16x128xf32>
    %3 = tpu.matmul %1, %2, %cst {dimension_numbers = #tpu.dot_dimension_numbers<[1], [0], [0], [1], [0, 0, 1, 1], [], []>} : vector<16x96xbf16>, vector<96x128xbf16>, vector<16x128xf32> -> vector<16x128xf32>
    %4 = arith.truncf %3 : vector<16x128xf32> to vector<16x128xbf16>
    %5 = vector.shape_cast %4 : vector<16x128xbf16> to vector<2x8x128xbf16>
    %c0_4 = arith.constant 0 : index
    %c0_5 = arith.constant 0 : index
    %c0_6 = arith.constant 0 : index
    %6 = vector.load %arg3[%c0_4, %c0_5, %c0_6] : memref<2x128x128xbf16, #tpu.memory_space<vmem>>, vector<2x128x128xbf16>
    "tpu.trace_start"() <{level = 10 : i32, message = "bef,bfl->bel"}> : () -> ()
    %cst_7 = arith.constant dense<0.000000e+00> : vector<2x8x128xf32>
    %7 = tpu.matmul %5, %6, %cst_7 {dimension_numbers = #tpu.dot_dimension_numbers<[2], [1], [1], [2], [0, 0, 0, 1, 1, 2], [0], [0]>} : vector<2x8x128xbf16>, vector<2x128x128xbf16>, vector<2x8x128xf32> -> vector<2x8x128xf32>
    "tpu.trace_stop"() : () -> ()
    %c0_8 = arith.constant 0 : index
    %c0_9 = arith.constant 0 : index
    %c0_10 = arith.constant 0 : index
    %8 = vector.load %arg4[%c0_8, %c0_9, %c0_10] : memref<2x1x128xf32, #tpu.memory_space<vmem>>, vector<2x1x128xf32>
    %9 = vector.broadcast %8 : vector<2x1x128xf32> to vector<2x8x128xf32>
    %10 = arith.addf %7, %9 : vector<2x8x128xf32>
    %c0_11 = arith.constant 0 : index
    %c0_12 = arith.constant 0 : index
    %c0_13 = arith.constant 0 : index
    %11 = vector.load %arg5[%c0_11, %c0_12, %c0_13] : memref<2x8x128xf32, #tpu.memory_space<vmem>>, vector<2x8x128xf32>
    tpu.vector_store %arg5[%c0_11, %c0_12, %c0_13], %10 {strides = array<i32>} : memref<2x8x128xf32, #tpu.memory_space<vmem>>, vector<2x8x128xf32>,
    return
  }
  func.func @transform_0(%arg0: i32) -> (i32, i32, i32) {
    %c0_i32 = arith.constant 0 : i32
    %c0_i32_0 = arith.constant 0 : i32
    %c0_i32_1 = arith.constant 0 : i32
    return %arg0, %c0_i32, %c0_i32_0 : i32, i32, i32
  }
  func.func @transform_1(%arg0: i32) -> (i32, i32) {
    %c0_i32 = arith.constant 0 : i32
    %c0_i32_0 = arith.constant 0 : i32
    %c0_i32_1 = arith.constant 0 : i32
    return %c0_i32, %c0_i32_0 : i32, i32
  }
  func.func @transform_2(%arg0: i32) -> (i32, i32, i32) {
    %c0_i32 = arith.constant 0 : i32
    %c0_i32_0 = arith.constant 0 : i32
    %c0_i32_1 = arith.constant 0 : i32
    return %arg0, %c0_i32, %c0_i32_0 : i32, i32, i32
  }
  func.func @transform_3(%arg0: i32) -> (i32, i32, i32) {
    %c0_i32 = arith.constant 0 : i32
    %c0_i32_0 = arith.constant 0 : i32
    %c0_i32_1 = arith.constant 0 : i32
    return %arg0, %c0_i32, %c0_i32_0 : i32, i32, i32
  }
  func.func @transform_4(%arg0: i32) -> (i32, i32, i32) {
    %c0_i32 = arith.constant 0 : i32
    %c0_i32_0 = arith.constant 0 : i32
    %c0_i32_1 = arith.constant 0 : i32
    return %arg0, %c0_i32, %c0_i32_0 : i32, i32, i32
  }
}

</mosaic_0001>

<llo_original>
// kernel: tpu_custom_call.1
$region0: #{tpu_custom_call.1}
  #allocation0 [shape = 'u32[]', space=smem, size = 0x4, offset = 0x4, fixed_abs, tag = 'smem constant byte address 0x4 - core index']
  #allocation1 [shape = 'u32[144,128]{1,0:T(1,128)}', space=vmem, size = 0x12000, scoped, tag = 'internal scratch']
  %s0 = inlined_call_operand.hbm [shape: bf16[2,8,96], index: 0, kind: input, shape index: {}]
  %s1 = inlined_call_operand.hbm [shape: bf16[96,128], index: 1, kind: input, shape index: {}]
  %s2 = inlined_call_operand.hbm [shape: bf16[2,128,128], index: 2, kind: input, shape index: {}]
  %s3 = inlined_call_operand.vmem [shape: f32[2,1,128], index: 3, kind: input, shape index: {}]
  %s4 = inlined_call_operand.hbm [shape: f32[2,8,128], index: 4, kind: output, shape index: {}]
  %s5 = sld [smem:[#allocation0]]
  $region38: #{tpu_custom_call.1} parent=0
    _
  %s7 = ssub.s32 1, %s5
  %s8 = scalar_select 0, %s7, %s5
  $region1: #{tpu_custom_call.1} parent=0
    #allocation2 [shape = 'u8[4096]{0}', space=vmem, size = 0x1000, scoped, tag = 'input window, operand 0, single buffered']
    #allocation3 [shape = 's32[1]{0}', space=sflag, size = 0x4, scoped, tag = 'scoped memory for tpu_custom_call.1']
    #allocation4 [shape = 's32[1]{0}', space=sflag, size = 0x4, scoped, tag = 'scoped memory for tpu_custom_call.1']
    #allocation5 [shape = 'u8[24576]{0}', space=vmem, size = 0x6000, scoped, tag = 'input window, operand 1, single buffered']
    #allocation6 [shape = 's32[1]{0}', space=sflag, size = 0x4, scoped, tag = 'scoped memory for tpu_custom_call.1']
    #allocation7 [shape = 'u8[65536]{0}', space=vmem, size = 0x10000, scoped, tag = 'input window, operand 2, single buffered']
    #allocation8 [shape = 'u8[8192]{0}', space=vmem, size = 0x2000, scoped, tag = 'output window, operand 0, single buffered']
    %9 = vsyncpa [#allocation3], 0
    %10 = vsyncpa [#allocation6], 0
    %11 = vsyncpa [#allocation4], 0
    // Predicated region
    $region2: #{tpu_custom_call.1} parent=1 // pred_check
      _
    $region3: #{tpu_custom_call.1} parent=1 // pred_check_branch
      %13 = sbr.rel (0) target = $region5
    $region4: #{tpu_custom_call.1} parent=1 // pred_region
      %s15 = ssub.s32 128, 128
      %16 = vsyncadd [#allocation3], %s15
      %s17 = sshll.u32 [#allocation2], 4
      %s18 = int_to_ptr.vmem [resolvable:$true] %s17
      %23 = dma.hbm_to_vmem [thread:$0]  %s0, 128, %s18, [#allocation3], 64, 64, 4
    $region5: #{tpu_custom_call.1} parent=1 // pred_fallthru
      _
    // Predicated region
    $region6: #{tpu_custom_call.1} parent=1 // pred_check
      _
    $region7: #{tpu_custom_call.1} parent=1 // pred_check_branch
      %25 = sbr.rel (0) target = $region9
    $region8: #{tpu_custom_call.1} parent=1 // pred_region
      %s27 = ssub.s32 768, 768
      %28 = vsyncadd [#allocation6], %s27
      %s29 = sshll.u32 [#allocation5], 4
      %s30 = int_to_ptr.vmem [resolvable:$true] %s29
      %35 = dma.hbm_to_vmem [thread:$0]  %s1, 768, %s30, [#allocation6], 64, 64, 4
    $region9: #{tpu_custom_call.1} parent=1 // pred_fallthru
      _
    // Predicated region
    $region10: #{tpu_custom_call.1} parent=1 // pred_check
      _
    $region11: #{tpu_custom_call.1} parent=1 // pred_check_branch
      %37 = sbr.rel (0) target = $region13
    $region12: #{tpu_custom_call.1} parent=1 // pred_region
      %s39 = ssub.s32 2048, 2048
      %40 = vsyncadd [#allocation6], %s39
      %s41 = sshll.u32 [#allocation7], 4
      %s42 = int_to_ptr.vmem [resolvable:$true] %s41
      %47 = dma.hbm_to_vmem [thread:$0]  %s2, 2048, %s42, [#allocation6], 64, 64, 4
    $region13: #{tpu_custom_call.1} parent=1 // pred_fallthru
      _
    // Predicated region
    $region14: #{tpu_custom_call.1} parent=1 // pred_check
      _
    $region15: #{tpu_custom_call.1} parent=1 // pred_check_branch
      %49 = sbr.rel (0) target = $region17
    $region16: #{tpu_custom_call.1} parent=1 // pred_region
      _
    $region17: #{tpu_custom_call.1} parent=1 // pred_fallthru
      _
    // Predicated region
    $region18: #{tpu_custom_call.1} parent=1 // pred_check
      _
    $region19: #{tpu_custom_call.1} parent=1 // pred_check_branch
      %51 = sbr.rel (0) target = $region21
    $region20: #{tpu_custom_call.1} parent=1 // pred_region
      %52 = dma.done [#allocation3], 128
    $region21: #{tpu_custom_call.1} parent=1 // pred_fallthru
      _
    // Predicated region
    $region22: #{tpu_custom_call.1} parent=1 // pred_check
      _
    $region23: #{tpu_custom_call.1} parent=1 // pred_check_branch
      %54 = sbr.rel (0) target = $region25
    $region24: #{tpu_custom_call.1} parent=1 // pred_region
      %55 = dma.done [#allocation6], 768
    $region25: #{tpu_custom_call.1} parent=1 // pred_fallthru
      _
    // Predicated region
    $region26: #{tpu_custom_call.1} parent=1 // pred_check
      _
    $region27: #{tpu_custom_call.1} parent=1 // pred_check_branch
      %57 = sbr.rel (0) target = $region29
    $region28: #{tpu_custom_call.1} parent=1 // pred_region
      %58 = dma.done [#allocation6], 2048
    $region29: #{tpu_custom_call.1} parent=1 // pred_fallthru
      _
    %v60 = vld [vmem:[#allocation2] sm:$0xf]
    %v61 = vld [vmem:[#allocation2 + $0x4] sm:$0xf]
    %v62 = vld [vmem:[#allocation5] sm:$0xf]
    %v63 = vld [vmem:[#allocation5 + $0x4] sm:$0xf]
    %v64 = vld [vmem:[#allocation5 + $0x8] sm:$0xf]
    %v65 = vld [vmem:[#allocation5 + $0xc] sm:$0xf]
    %v66 = vld [vmem:[#allocation5 + $0x10] sm:$0xf]
    %v67 = vld [vmem:[#allocation5 + $0x14] sm:$0xf]
    %v68 = vld [vmem:[#allocation5 + $0x18] sm:$0xf]
    %v69 = vld [vmem:[#allocation5 + $0x1c] sm:$0xf]
    %v70 = vld [vmem:[#allocation5 + $0x20] sm:$0xf]
    %v71 = vld [vmem:[#allocation5 + $0x24] sm:$0xf]
    %v72 = vld [vmem:[#allocation5 + $0x28] sm:$0xf]
    %v73 = vld [vmem:[#allocation5 + $0x2c] sm:$0xf]
    %v76 = vunpack.c.l.b16 %v60
    %v77 = vunpack.c.l.b16 %v61
    %v78 = vpack.c.b16 %v77, %v76
    %v91 = vunpack.c.l.b16 %v62
    %v92 = vunpack.c.l.b16 %v63
    %v93 = vunpack.c.l.b16 %v64
    %v94 = vunpack.c.l.b16 %v65
    %v95 = vunpack.c.l.b16 %v66
    %v96 = vunpack.c.l.b16 %v67
    %v97 = vunpack.c.l.b16 %v68
    %v98 = vunpack.c.l.b16 %v69
    %v99 = vunpack.c.l.b16 %v70
    %v100 = vunpack.c.l.b16 %v71
    %v101 = vunpack.c.l.b16 %v72
    %v102 = vunpack.c.l.b16 %v73
    %v103 = vpack.c.b16 %v92, %v91
    %v104 = vpack.c.b16 %v94, %v93
    %v105 = vpack.c.b16 %v96, %v95
    %v106 = vpack.c.b16 %v98, %v97
    %v107 = vpack.c.b16 %v100, %v99
    %v108 = vpack.c.b16 %v102, %v101
    %vm115 = vcmask 785408
    %v117 = vsel %vm115, %v78, 0
    %119 = vmatprep.subr.bf16.mxu0 0
    %120 = vmatpush1.bf16.msra.mxu0 %v103
    %121 = vmatprep.subr.bf16.mxu0 0
    %122 = vmatpush1.bf16.msra.mxu0 %v104
    %123 = vmatprep.subr.bf16.mxu0 0
    %124 = vmatpush1.bf16.msra.mxu0 %v105
    %125 = vmatprep.subr.bf16.mxu0 0
    %126 = vmatpush1.bf16.msra.mxu0 %v106
    %127 = vmatprep.subr.bf16.mxu0 0
    %128 = vmatpush1.bf16.msra.mxu0 %v107
    %129 = vmatprep.subr.bf16.mxu0 0
    %130 = vmatpush1.bf16.msra.mxu0 %v108
    %131 = vmatprep.subr.bf16.mxu0 0
    %132 = vmatpush1.bf16.msra.mxu0 0
    %133 = vmatprep.subr.bf16.mxu0 0
    %134 = vmatpush1.bf16.msra.mxu0 0
    %135 = vmatprep.subr.bf16.mxu0 0
    %136 = vmatpush1.bf16.msra.mxu0 0
    %137 = vmatprep.subr.bf16.mxu0 0
    %138 = vmatpush1.bf16.msra.mxu0 0
    %139 = vmatprep.subr.bf16.mxu0 0
    %140 = vmatpush1.bf16.msra.mxu0 0
    %141 = vmatprep.subr.bf16.mxu0 0
    %142 = vmatpush1.bf16.msra.mxu0 0
    %143 = vmatprep.subr.bf16.mxu0 0
    %144 = vmatpush1.bf16.msra.mxu0 0
    %145 = vmatprep.subr.bf16.mxu0 0
    %146 = vmatpush1.bf16.msra.mxu0 0
    %147 = vmatprep.subr.bf16.mxu0 0
    %148 = vmatpush1.bf16.msra.mxu0 0
    %149 = vmatprep.subr.bf16.mxu0 0
    %150 = vmatpush1.bf16.msra.mxu0 0
    %151 = vmatprep.mubr.bf16.mxu0 0
    %152 = vmatmul.mubr.bf16.gmra.mrb[0].mxu0 %v117
    %v153 = vpop.f32.mrb[0].mxu0
    %v154 = vadd.f32 0.0, %v153
    %v155 = vpop.f32.mrb[0].mxu0
    %v156 = vpop.f32.mrb[0].mxu0
    %v157 = vadd.f32 0.0, %v156
    %v158 = vpop.f32.mrb[0].mxu0
    %159 = vdwg.mxu0
    %v160 = vpack.c.bf16 %v157, %v154
    %v162 = vunpack.c.l.b16 %v160
    %v163 = vunpack.c.h.b16 %v160
    %v164 = vpack.c.b16 %v162, %v162
    %v165 = vpack.c.b16 %v163, %v163
    %v168 = vld [vmem:[#allocation7] sm:$0xf]
    %v169 = vld [vmem:[#allocation7 + $0x4] sm:$0xf]
    %v170 = vld [vmem:[#allocation7 + $0x8] sm:$0xf]
    %v171 = vld [vmem:[#allocation7 + $0xc] sm:$0xf]
    %v172 = vld [vmem:[#allocation7 + $0x10] sm:$0xf]
    %v173 = vld [vmem:[#allocation7 + $0x14] sm:$0xf]
    %v174 = vld [vmem:[#allocation7 + $0x18] sm:$0xf]
    %v175 = vld [vmem:[#allocation7 + $0x1c] sm:$0xf]
    %v176 = vld [vmem:[#allocation7 + $0x20] sm:$0xf]
    %v177 = vld [vmem:[#allocation7 + $0x24] sm:$0xf]
    %v178 = vld [vmem:[#allocation7 + $0x28] sm:$0xf]
    %v179 = vld [vmem:[#allocation7 + $0x2c] sm:$0xf]
    %v180 = vld [vmem:[#allocation7 + $0x30] sm:$0xf]
    %v181 = vld [vmem:[#allocation7 + $0x34] sm:$0xf]
    %v182 = vld [vmem:[#allocation7 + $0x38] sm:$0xf]
    %v183 = vld [vmem:[#allocation7 + $0x3c] sm:$0xf]
    %v184 = vld [vmem:[#allocation7 + $0x40] sm:$0xf]
    %v185 = vld [vmem:[#allocation7 + $0x44] sm:$0xf]
    %v186 = vld [vmem:[#allocation7 + $0x48] sm:$0xf]
    %v187 = vld [vmem:[#allocation7 + $0x4c] sm:$0xf]
    %v188 = vld [vmem:[#allocation7 + $0x50] sm:$0xf]
    %v189 = vld [vmem:[#allocation7 + $0x54] sm:$0xf]
    %v190 = vld [vmem:[#allocation7 + $0x58] sm:$0xf]
    %v191 = vld [vmem:[#allocation7 + $0x5c] sm:$0xf]
    %v192 = vld [vmem:[#allocation7 + $0x60] sm:$0xf]
    %v193 = vld [vmem:[#allocation7 + $0x64] sm:$0xf]
    %v194 = vld [vmem:[#allocation7 + $0x68] sm:$0xf]
    %v195 = vld [vmem:[#allocation7 + $0x6c] sm:$0xf]
    %v196 = vld [vmem:[#allocation7 + $0x70] sm:$0xf]
    %v197 = vld [vmem:[#allocation7 + $0x74] sm:$0xf]
    %v198 = vld [vmem:[#allocation7 + $0x78] sm:$0xf]
    %v199 = vld [vmem:[#allocation7 + $0x7c] sm:$0xf]
    %v200 = vld [vmem:[%s3] sm:$0x1]
    %v201 = vld [vmem:[%s3 + $0x1] sm:$0x1]
    %v204 = vlaneseq
    %v205 = vshrl.u32 %v204, 7
    %v206 = vsub.s32 0, %v205
    %v207 = vrot.slane %v200, %v206
    %v208 = vlaneseq
    %v209 = vshrl.u32 %v208, 7
    %v210 = vsub.s32 0, %v209
    %v211 = vrot.slane %v201, %v210
    %v230 = vunpack.c.l.b16 %v168
    %v231 = vunpack.c.l.b16 %v169
    %v232 = vunpack.c.l.b16 %v170
    %v233 = vunpack.c.l.b16 %v171
    %v234 = vunpack.c.l.b16 %v172
    %v235 = vunpack.c.l.b16 %v173
    %v236 = vunpack.c.l.b16 %v174
    %v237 = vunpack.c.l.b16 %v175
    %v238 = vunpack.c.l.b16 %v176
    %v239 = vunpack.c.l.b16 %v177
    %v240 = vunpack.c.l.b16 %v178
    %v241 = vunpack.c.l.b16 %v179
    %v242 = vunpack.c.l.b16 %v180
    %v243 = vunpack.c.l.b16 %v181
    %v244 = vunpack.c.l.b16 %v182
    %v245 = vunpack.c.l.b16 %v183
    %v246 = vpack.c.b16 %v231, %v230
    %v247 = vpack.c.b16 %v233, %v232
    %v248 = vpack.c.b16 %v235, %v234
    %v249 = vpack.c.b16 %v237, %v236
    %v250 = vpack.c.b16 %v239, %v238
    %v251 = vpack.c.b16 %v241, %v240
    %v252 = vpack.c.b16 %v243, %v242
    %v253 = vpack.c.b16 %v245, %v244
    %262 = vmatprep.subr.bf16.mxu0 0
    %263 = vmatpush1.bf16.msra.mxu0 %v246
    %264 = vmatprep.subr.bf16.mxu0 0
    %265 = vmatpush1.bf16.msra.mxu0 %v247
    %266 = vmatprep.subr.bf16.mxu0 0
    %267 = vmatpush1.bf16.msra.mxu0 %v248
    %268 = vmatprep.subr.bf16.mxu0 0
    %269 = vmatpush1.bf16.msra.mxu0 %v249
    %270 = vmatprep.subr.bf16.mxu0 0
    %271 = vmatpush1.bf16.msra.mxu0 %v250
    %272 = vmatprep.subr.bf16.mxu0 0
    %273 = vmatpush1.bf16.msra.mxu0 %v251
    %274 = vmatprep.subr.bf16.mxu0 0
    %275 = vmatpush1.bf16.msra.mxu0 %v252
    %276 = vmatprep.subr.bf16.mxu0 0
    %277 = vmatpush1.bf16.msra.mxu0 %v253
    %278 = vmatprep.subr.bf16.mxu0 0
    %279 = vmatpush1.bf16.msra.mxu0 0
    %280 = vmatprep.subr.bf16.mxu0 0
    %281 = vmatpush1.bf16.msra.mxu0 0
    %282 = vmatprep.subr.bf16.mxu0 0
    %283 = vmatpush1.bf16.msra.mxu0 0
    %284 = vmatprep.subr.bf16.mxu0 0
    %285 = vmatpush1.bf16.msra.mxu0 0
    %286 = vmatprep.subr.bf16.mxu0 0
    %287 = vmatpush1.bf16.msra.mxu0 0
    %288 = vmatprep.subr.bf16.mxu0 0
    %289 = vmatpush1.bf16.msra.mxu0 0
    %290 = vmatprep.subr.bf16.mxu0 0
    %291 = vmatpush1.bf16.msra.mxu0 0
    %292 = vmatprep.subr.bf16.mxu0 0
    %293 = vmatpush1.bf16.msra.mxu0 0
    %294 = vmatprep.mubr.bf16.mxu0 0
    %295 = vmatmul.mubr.bf16.gmra.mrb[0].mxu0 %v164
    %v296 = vpop.f32.mrb[0].mxu0
    %v297 = vadd.f32 %v207, %v296
    %v298 = vpop.f32.mrb[0].mxu0
    %v299 = vpop.f32.mrb[0].mxu0
    %v300 = vpop.f32.mrb[0].mxu0
    %301 = vdwg.mxu0
    %v318 = vunpack.c.l.b16 %v184
    %v319 = vunpack.c.l.b16 %v185
    %v320 = vunpack.c.l.b16 %v186
    %v321 = vunpack.c.l.b16 %v187
    %v322 = vunpack.c.l.b16 %v188
    %v323 = vunpack.c.l.b16 %v189
    %v324 = vunpack.c.l.b16 %v190
    %v325 = vunpack.c.l.b16 %v191
    %v326 = vunpack.c.l.b16 %v192
    %v327 = vunpack.c.l.b16 %v193
    %v328 = vunpack.c.l.b16 %v194
    %v329 = vunpack.c.l.b16 %v195
    %v330 = vunpack.c.l.b16 %v196
    %v331 = vunpack.c.l.b16 %v197
    %v332 = vunpack.c.l.b16 %v198
    %v333 = vunpack.c.l.b16 %v199
    %v334 = vpack.c.b16 %v319, %v318
    %v335 = vpack.c.b16 %v321, %v320
    %v336 = vpack.c.b16 %v323, %v322
    %v337 = vpack.c.b16 %v325, %v324
    %v338 = vpack.c.b16 %v327, %v326
    %v339 = vpack.c.b16 %v329, %v328
    %v340 = vpack.c.b16 %v331, %v330
    %v341 = vpack.c.b16 %v333, %v332
    %350 = vmatprep.subr.bf16.mxu0 0
    %351 = vmatpush1.bf16.msra.mxu0 %v334
    %352 = vmatprep.subr.bf16.mxu0 0
    %353 = vmatpush1.bf16.msra.mxu0 %v335
    %354 = vmatprep.subr.bf16.mxu0 0
    %355 = vmatpush1.bf16.msra.mxu0 %v336
    %356 = vmatprep.subr.bf16.mxu0 0
    %357 = vmatpush1.bf16.msra.mxu0 %v337
    %358 = vmatprep.subr.bf16.mxu0 0
    %359 = vmatpush1.bf16.msra.mxu0 %v338
    %360 = vmatprep.subr.bf16.mxu0 0
    %361 = vmatpush1.bf16.msra.mxu0 %v339
    %362 = vmatprep.subr.bf16.mxu0 0
    %363 = vmatpush1.bf16.msra.mxu0 %v340
    %364 = vmatprep.subr.bf16.mxu0 0
    %365 = vmatpush1.bf16.msra.mxu0 %v341
    %366 = vmatprep.subr.bf16.mxu0 0
    %367 = vmatpush1.bf16.msra.mxu0 0
    %368 = vmatprep.subr.bf16.mxu0 0
    %369 = vmatpush1.bf16.msra.mxu0 0
    %370 = vmatprep.subr.bf16.mxu0 0
    %371 = vmatpush1.bf16.msra.mxu0 0
    %372 = vmatprep.subr.bf16.mxu0 0
    %373 = vmatpush1.bf16.msra.mxu0 0
    %374 = vmatprep.subr.bf16.mxu0 0
    %375 = vmatpush1.bf16.msra.mxu0 0
    %376 = vmatprep.subr.bf16.mxu0 0
    %377 = vmatpush1.bf16.msra.mxu0 0
    %378 = vmatprep.subr.bf16.mxu0 0
    %379 = vmatpush1.bf16.msra.mxu0 0
    %380 = vmatprep.subr.bf16.mxu0 0
    %381 = vmatpush1.bf16.msra.mxu0 0
    %382 = vmatprep.mubr.bf16.mxu0 0
    %383 = vmatmul.mubr.bf16.gmra.mrb[0].mxu0 %v165
    %v384 = vpop.f32.mrb[0].mxu0
    %v385 = vadd.f32 %v211, %v384
    %v386 = vpop.f32.mrb[0].mxu0
    %v387 = vpop.f32.mrb[0].mxu0
    %v388 = vpop.f32.mrb[0].mxu0
    %389 = vdwg.mxu0
    %390 = vst [vmem:[#allocation8] sm:$0xff] %v297
    %391 = vst [vmem:[#allocation8 + $0x8] sm:$0xff] %v385
    // Predicated region
    $region30: #{tpu_custom_call.1} parent=1 // pred_check
      _
    $region31: #{tpu_custom_call.1} parent=1 // pred_check_branch
      %393 = sbr.rel (0) target = $region33
    $region32: #{tpu_custom_call.1} parent=1 // pred_region
      %s395 = ssub.s32 256, 256
      %396 = vsyncadd [#allocation4], %s395
      %s397 = sshll.u32 [#allocation8], 4
      %s398 = int_to_ptr.vmem [resolvable:$true] %s397
      %403 = dma.vmem_to_hbm [thread:$0]  %s398, 256, %s4, [#allocation4], 128, 128, 8
    $region33: #{tpu_custom_call.1} parent=1 // pred_fallthru
      _
    // Predicated region
    $region34: #{tpu_custom_call.1} parent=1 // pred_check
      _
    $region35: #{tpu_custom_call.1} parent=1 // pred_check_branch
      %405 = sbr.rel (0) target = $region37
    $region36: #{tpu_custom_call.1} parent=1 // pred_region
      %406 = dma.done [#allocation4], 256
    $region37: #{tpu_custom_call.1} parent=1 // pred_fallthru
      _
    %407 = vsyncpa [#allocation3], 1
    %408 = vsyncpa [#allocation6], 1
    %409 = vsyncpa [#allocation4], 1

</llo_original>
